<compile_context>
chip_gen: v5e
topology: v5e:2x2
jax: 0.10.0
libtpu: 0.0.40
codegen_flags: <defaults>
</compile_context>

<pallas_src>
import functools

import jax
import jax.numpy as jnp
from jax import lax
from jax.experimental import pallas as pl
from jax.experimental.pallas import tpu as pltpu


# --------------------------------------------------------------------------- #
# Path B: spatially tiled accumulation (large H*W).                            #
# --------------------------------------------------------------------------- #
def _ca_tiled_kernel(x_ref, w1t_ref, w2t_ref, o_ref, sum_ref, max_ref, *,
                     hw, hw_tile, tail):
    """grid = (batch, spatial_tiles); x block = (1, C, hw_tile)."""
    k = pl.program_id(1)
    last = pl.num_programs(1) - 1
    n_chunks = hw_tile // 128

    @pl.when(k == 0)
    def _init():
        sum_ref[...] = jnp.zeros_like(sum_ref)
        max_ref[...] = jnp.full_like(max_ref, -jnp.inf)

    def accumulate(x):
        # Lane-parallel partials: pure VALU adds/maxes in the hot loop; the
        # cross-lane (XLU) reduce happens once per image in the finalize.
        # 128-lane static slices are layout-aligned (no relayout/copy).
        for t in range(n_chunks):
            chunk = x[:, t * 128:(t + 1) * 128]
            sum_ref[...] += chunk.astype(jnp.float32)
            max_ref[...] = jnp.maximum(max_ref[...], chunk)   # exact in bf16

    if tail == 0:
        accumulate(x_ref[0])
    else:
        # Only the ragged last tile carries Pallas' padded-edge garbage; keep
        # the iota/compare/where mask entirely out of the hot loop.
        @pl.when(k != last)
        def _hot():
            accumulate(x_ref[0])

        @pl.when(k == last)
        def _ragged_tail():
            x = x_ref[0]
            full = tail // 128
            for t in range(full):                      # fully valid chunks
                chunk = x[:, t * 128:(t + 1) * 128]
                sum_ref[...] += chunk.astype(jnp.float32)
                max_ref[...] = jnp.maximum(max_ref[...], chunk)
            rem = tail - full * 128
            if rem:                                    # single partial chunk
                chunk = x[:, full * 128:(full + 1) * 128]
                lane = lax.broadcasted_iota(jnp.int32, chunk.shape, 1)
                valid = lane < rem
                sum_ref[...] += jnp.where(valid, chunk, 0).astype(jnp.float32)
                max_ref[...] = jnp.maximum(
                    max_ref[...],
                    jnp.where(valid, chunk, jnp.array(-jnp.inf, chunk.dtype)))
            # chunks past ceil(tail/128) hold no valid data -> skipped.

    @pl.when(k == last)
    def _finalize():
        ones_row = jnp.ones((1, 128), jnp.float32)
        # Collapse the 128 lane-partials of the sum straight into a lane-dense
        # (1, C) row on the MXU (one NT matmul; also converts column->row).
        avg_row = lax.dot_general(
            ones_row, sum_ref[...], (((1,), (1,)), ((), ())),
            preferred_element_type=jnp.float32) * (1.0 / hw)            # (1, C)
        # Max needs the XLU cross-lane reduce; convert the (C, 1) column to a
        # lane-dense row with a one-hot NT matmul (runs once per image).
        max_col = jnp.max(max_ref[...].astype(jnp.float32), axis=-1,
                          keepdims=True)                                 # (C, 1)
        sel = (lax.broadcasted_iota(jnp.int32, (1, 128), 1) == 0
               ).astype(jnp.float32)
        max_row = lax.dot_general(
            sel, max_col * ones_row, (((1,), (1,)), ((), ())),
            preferred_element_type=jnp.float32)                          # (1, C)

        w1t = w1t_ref[...].astype(jnp.float32)                           # (C, Cr)
        w2t = w2t_ref[...].astype(jnp.float32)                           # (Cr, C)
        # fc2 is linear & bias-free => apply once to the summed relu branches.
        h = (jnp.maximum(jnp.dot(avg_row, w1t,
                                 preferred_element_type=jnp.float32), 0.0)
             + jnp.maximum(jnp.dot(max_row, w1t,
                                   preferred_element_type=jnp.float32), 0.0))
        y = jnp.dot(h, w2t, preferred_element_type=jnp.float32)          # (1, C)
        o_ref[0] = jax.nn.sigmoid(y).astype(o_ref.dtype)


# --------------------------------------------------------------------------- #
# Path A: whole image(s) per block (small H*W — the common SE/CBAM case).      #
# --------------------------------------------------------------------------- #
def _ca_batched_kernel(x_ref, w1t_ref, w2t_ref, o_ref, *, hw, tb):
    """grid = (B // tb,); x block = (tb, C, H*W)."""
    w1t = w1t_ref[...].astype(jnp.float32)                               # (C, Cr)
    w2t = w2t_ref[...].astype(jnp.float32)                               # (Cr, C)
    ones_row = jnp.ones((1, 128), jnp.float32)
    sel = (lax.broadcasted_iota(jnp.int32, (1, 128), 1) == 0
           ).astype(jnp.float32)
    inv_hw = 1.0 / hw

    def to_row(col):                                                     # (C,1)->(1,C)
        return lax.dot_general(sel, col * ones_row, (((1,), (1,)), ((), ())),
                               preferred_element_type=jnp.float32)

    for b in range(tb):                     # static unroll (tb is capped small)
        x = x_ref[b].astype(jnp.float32)                                 # (C, HW)
        s = jnp.sum(x, axis=-1, keepdims=True)                           # (C, 1)
        m = jnp.max(x, axis=-1, keepdims=True)                           # (C, 1)
        avg_row = to_row(s) * inv_hw
        max_row = to_row(m)
        h = (jnp.maximum(jnp.dot(avg_row, w1t,
                                 preferred_element_type=jnp.float32), 0.0)
             + jnp.maximum(jnp.dot(max_row, w1t,
                                   preferred_element_type=jnp.float32), 0.0))
        y = jnp.dot(h, w2t, preferred_element_type=jnp.float32)          # (1, C)
        o_ref[b] = jax.nn.sigmoid(y).astype(o_ref.dtype)


# --------------------------------------------------------------------------- #
# Wrapper / tiling policy.                                                     #
# --------------------------------------------------------------------------- #
def _tpu_budgets():
    """(per-block byte budget, scoped-VMEM limit), generation aware."""
    try:
        vmem_cap = int(pltpu.get_tpu_info().vmem_capacity_bytes)
    except Exception:
        vmem_cap = 64 * 1024 * 1024           # conservative: v7x per-TC VMEM
    if vmem_cap >= 96 * 1024 * 1024:          # v5e / v6e: 128 MiB physical VMEM
        return 8 * 1024 * 1024, 64 * 1024 * 1024
    # v7x: 64 MiB per TensorCore; keep 2x block + weights + scratch well under.
    return 4 * 1024 * 1024, 32 * 1024 * 1024


def _pick_hw_tile(hw, c, itemsize, budget):
    """Largest multiple-of-128 spatial tile under the per-block byte budget."""
    lanes = max(1, budget // max(1, c * itemsize))
    return max(128, (lanes // 128) * 128)


def _pick_batch_tile(b, per_image_bytes, budget, max_unroll=8):
    cap = min(b, max_unroll, max(1, budget // max(1, per_image_bytes)))
    for tb in range(cap, 0, -1):
        if b % tb == 0:
            return tb
    return 1


def _cost_estimate(b, c, cr, hw, x_itemsize, w_itemsize):
    return pl.CostEstimate(
        flops=int(2 * b * c * hw + 6 * b * c * cr),
        transcendentals=int(b * c),
        bytes_accessed=int(b * c * hw * x_itemsize
                           + 2 * c * cr * w_itemsize
                           + b * c * x_itemsize),
    )


def channel_attention(x_nchw, w1, w2, *, hw_tile=None):
    """Fused SE/CBAM channel attention.

    x_nchw: (B, C, H, W);  w1: (C//ratio, C) fc1 weight;  w2: (C, C//ratio).
    Returns the (B, C, 1, 1) sigmoid gate in x's dtype.
    """
    B, C, H, W = x_nchw.shape
    Cr = w1.shape[0]
    HW = H * W
    x = x_nchw.reshape(B, C, HW)
    itemsize = x.dtype.itemsize
    out_dtype = x.dtype

    block_budget, vmem_limit = _tpu_budgets()

    # 1x1-conv weights as matrices, pre-transposed (free, outside the kernel)
    # so in-kernel dots are plain (M,K)@(K,N) with Cr / C on the lane axis.
    w1t = jnp.transpose(w1)          # (C, Cr)
    w2t = jnp.transpose(w2)          # (Cr, C)

    if hw_tile is None:
        hw_tile = _pick_hw_tile(HW, C, itemsize, block_budget)
    elif hw_tile < HW and hw_tile % 128 != 0:
        raise ValueError("hw_tile must be a multiple of 128 or >= H*W")

    cost = _cost_estimate(B, C, Cr, HW, itemsize, w1.dtype.itemsize)

    if hw_tile >= HW:
        # ---- Path A: whole image(s) per block, batch-tiled. ----
        TB = _pick_batch_tile(B, C * HW * itemsize, block_budget)
        out = pl.pallas_call(
            functools.partial(_ca_batched_kernel, hw=HW, tb=TB),
            out_shape=jax.ShapeDtypeStruct((B, 1, C), out_dtype),
            grid_spec=pltpu.PrefetchScalarGridSpec(
                num_scalar_prefetch=0,
                grid=(B // TB,),
                in_specs=[
                    pl.BlockSpec((TB, C, HW), lambda i: (i, 0, 0)),
                    # Weight blocks are grid-invariant (re-DMA is skipped);
                    # default double-buffering only costs a few KiB here.
                    pl.BlockSpec((C, Cr), lambda i: (0, 0)),
                    pl.BlockSpec((Cr, C), lambda i: (0, 0)),
                ],
                out_specs=pl.BlockSpec((TB, 1, C), lambda i: (i, 0, 0)),
            ),
            compiler_params=pltpu.CompilerParams(
                dimension_semantics=("parallel",),
                vmem_limit_bytes=vmem_limit,
            ),
            cost_estimate=cost,
        )(x, w1t, w2t)
    else:
        # ---- Path B: spatial tiling with running sum/max partials. ----
        nk = pl.cdiv(HW, hw_tile)
        tail = HW % hw_tile
        out = pl.pallas_call(
            functools.partial(_ca_tiled_kernel, hw=HW, hw_tile=hw_tile,
                              tail=tail),
            out_shape=jax.ShapeDtypeStruct((B, 1, C), out_dtype),
            grid_spec=pltpu.PrefetchScalarGridSpec(
                num_scalar_prefetch=0,
                grid=(B, nk),
                in_specs=[
                    pl.BlockSpec((1, C, hw_tile), lambda b, k: (b, 0, k)),
                    pl.BlockSpec((C, Cr), lambda b, k: (0, 0)),
                    pl.BlockSpec((Cr, C), lambda b, k: (0, 0)),
                ],
                out_specs=pl.BlockSpec((1, 1, C), lambda b, k: (b, 0, 0)),
                scratch_shapes=[
                    pltpu.VMEM((C, 128), jnp.float32),   # lane-parallel sum
                    pltpu.VMEM((C, 128), x.dtype),       # lane-parallel max
                ],
            ),
            compiler_params=pltpu.CompilerParams(
                dimension_semantics=("parallel", "arbitrary"),
                vmem_limit_bytes=vmem_limit,
            ),
            cost_estimate=cost,
        )(x, w1t, w2t)

    # TODO(synk): when B < #TensorCores (v7x megacore), the batch-only parallel
    # axis leaves a core idle; a core-split of the spatial axis with a partial
    # reduce/combine would recover up to 2x there.
    return out.reshape(B, C, 1, 1)


def channel_attention_ref(x_nchw, w1, w2):
    """Pure-JAX reference mirroring the PyTorch forward (f32 math)."""
    xf = x_nchw.astype(jnp.float32)
    avg = jnp.mean(xf, axis=(2, 3))                 # (B, C)
    mx = jnp.max(xf, axis=(2, 3))                   # (B, C)

    def mlp(v):
        h = jnp.maximum(v @ w1.T, 0.0)              # (B, Cr)
        return h @ w2.T                             # (B, C)

    out = jax.nn.sigmoid(mlp(avg) + mlp(mx))
    return out.reshape(*out.shape, 1, 1)


if __name__ == "__main__":
    B, C, H, W = 2, 16, 16, 16
    ratio = 8
    Cr = C // ratio

    key = jax.random.PRNGKey(0)
    kx, k1, k2, kx2 = jax.random.split(key, 4)
    x = jax.random.normal(kx, (B, C, H, W), dtype=jnp.float32)
    # 1x1 conv weights (bias=False) are just (out_ch, in_ch) matrices.
    w1 = jax.random.normal(k1, (Cr, C), dtype=jnp.float32) * 0.2
    w2 = jax.random.normal(k2, (C, Cr), dtype=jnp.float32) * 0.2

    ref = channel_attention_ref(x, w1, w2)

    # 1) Auto path: whole (C, H*W) plane fits in one block -> batched
    #    single-block kernel (Path A), grid = (B // TB,).
    out = channel_attention(x, w1, w2)
    # 2) Forced 128-lane spatial tiling -> spatially-tiled accumulator kernel
    #    (Path B), grid = (B, 2), no ragged tail.
    out_tiled = channel_attention(x, w1, w2, hw_tile=128)
    jax.block_until_ready((out, out_tiled))
    assert out.shape == (B, C, 1, 1)
    assert jnp.allclose(out, ref, atol=1e-5, rtol=1e-5), "batched path mismatch"
    assert jnp.allclose(out_tiled, ref, atol=1e-5, rtol=1e-5), "tiled path mismatch"

    # 3) Ragged spatial extent (12*12 = 144): exercises the cold masked-tail path.
    x2 = jax.random.normal(kx2, (B, C, 12, 12), dtype=jnp.float32)
    out2 = channel_attention(x2, w1, w2, hw_tile=128)
    jax.block_until_ready(out2)
    ref2 = channel_attention_ref(x2, w1, w2)
    assert jnp.allclose(out2, ref2, atol=1e-5, rtol=1e-5), "masked-tail mismatch"

    # 4) bf16 input on both paths (bf16 DMA + bf16 running max, f32 sums; gate
    #    emitted directly in bf16).
    xb = x.astype(jnp.bfloat16)
    out_b = channel_attention(xb, w1, w2)
    out_bt = channel_attention(xb, w1, w2, hw_tile=128)
    jax.block_until_ready((out_b, out_bt))
    ref_b = channel_attention_ref(xb.astype(jnp.float32), w1, w2)
    assert jnp.allclose(out_b.astype(jnp.float32), ref_b, atol=1e-2, rtol=1e-2), \
        "bf16 batched mismatch"
    assert jnp.allclose(out_bt.astype(jnp.float32), ref_b, atol=1e-2, rtol=1e-2), \
        "bf16 tiled mismatch"

    print("KERNEL_OK")
</pallas_src>

<mosaic_0001>
module attributes {stable_mosaic.version = 11 : i64} {
  func.func @_ca_batched_kernel(%arg0: i32, %arg1: memref<2x16x256xf32, #tpu.memory_space<vmem>>, %arg2: memref<16x2xf32, #tpu.memory_space<vmem>>, %arg3: memref<2x16xf32, #tpu.memory_space<vmem>>, %arg4: memref<2x1x16xf32, #tpu.memory_space<vmem>>) attributes {dimension_semantics = [#tpu.dimension_semantics<parallel>], iteration_bounds = array<i64: 1>, scalar_prefetch = 0 : i64, scratch_operands = 0 : i64, tpu.core_type = #tpu.core_type<tc>, window_params = [{transform_indices = @transform_0, window_bounds = array<i64: 2, 16, 256>}, {pipeline_mode = #tpu.pipeline_mode<synchronous>, transform_indices = @transform_1, window_bounds = array<i64: 16, 2>}, {pipeline_mode = #tpu.pipeline_mode<synchronous>, transform_indices = @transform_2, window_bounds = array<i64: 2, 16>}, {transform_indices = @transform_3, window_bounds = array<i64: 2, 1, 16>}]} {
    %c0 = arith.constant 0 : index
    %c0_0 = arith.constant 0 : index
    %0 = vector.load %arg2[%c0, %c0_0] : memref<16x2xf32, #tpu.memory_space<vmem>>, vector<16x2xf32>
    %c0_1 = arith.constant 0 : index
    %c0_2 = arith.constant 0 : index
    %1 = vector.load %arg3[%c0_1, %c0_2] : memref<2x16xf32, #tpu.memory_space<vmem>>, vector<2x16xf32>
    %cst = arith.constant 1.000000e+00 : f32
    %2 = vector.broadcast %cst : f32 to vector<1x128xf32>
    %3 = tpu.iota {dimensions = array<i32: 1>} : vector<1x128xi32>
    %c0_i32 = arith.constant 0 : i32
    %4 = vector.broadcast %c0_i32 : i32 to vector<1x128xi32>
    %5 = arith.cmpi eq, %3, %4 : vector<1x128xi32>
    %6 = arith.extui %5 : vector<1x128xi1> to vector<1x128xi32>
    %7 = arith.sitofp %6 : vector<1x128xi32> to vector<1x128xf32>
    %c0_3 = arith.constant 0 : index
    %c0_4 = arith.constant 0 : index
    %c0_5 = arith.constant 0 : index
    %8 = vector.load %arg1[%c0_3, %c0_4, %c0_5] : memref<2x16x256xf32, #tpu.memory_space<vmem>>, vector<1x16x256xf32>
    %9 = vector.shape_cast %8 : vector<1x16x256xf32> to vector<16x256xf32>
    %cst_6 = arith.constant dense<0.000000e+00> : vector<16xf32>
    %10 = vector.multi_reduction <add>, %9, %cst_6 [1] : vector<16x256xf32> to vector<16xf32>
    %11 = vector.shape_cast %10 : vector<16xf32> to vector<16x1xf32>
    %cst_7 = arith.constant dense<0xFF800000> : vector<16xf32>
    %12 = vector.multi_reduction <maximumf>, %9, %cst_7 [1] : vector<16x256xf32> to vector<16xf32>
    %13 = vector.shape_cast %12 : vector<16xf32> to vector<16x1xf32>
    %14 = vector.broadcast %11 : vector<16x1xf32> to vector<16x128xf32>
    %15 = vector.broadcast %2 : vector<1x128xf32> to vector<16x128xf32>
    %16 = arith.mulf %14, %15 : vector<16x128xf32>
    %cst_8 = arith.constant dense<0.000000e+00> : vector<1x16xf32>
    %17 = tpu.matmul %7, %16, %cst_8 {dimension_numbers = #tpu.dot_dimension_numbers<[1], [1], [0], [0], [0, 0, 1, 0], [], []>} : vector<1x128xf32>, vector<16x128xf32>, vector<1x16xf32> -> vector<1x16xf32>
    %cst_9 = arith.constant 3.906250e-03 : f32
    %18 = vector.broadcast %cst_9 : f32 to vector<1x16xf32>
    %19 = arith.mulf %17, %18 : vector<1x16xf32>
    %20 = vector.broadcast %13 : vector<16x1xf32> to vector<16x128xf32>
    %21 = vector.broadcast %2 : vector<1x128xf32> to vector<16x128xf32>
    %22 = arith.mulf %20, %21 : vector<16x128xf32>
    %cst_10 = arith.constant dense<0.000000e+00> : vector<1x16xf32>
    %23 = tpu.matmul %7, %22, %cst_10 {dimension_numbers = #tpu.dot_dimension_numbers<[1], [1], [0], [0], [0, 0, 1, 0], [], []>} : vector<1x128xf32>, vector<16x128xf32>, vector<1x16xf32> -> vector<1x16xf32>
    %cst_11 = arith.constant dense<0.000000e+00> : vector<1x2xf32>
    %24 = tpu.matmul %19, %0, %cst_11 {dimension_numbers = #tpu.dot_dimension_numbers<[1], [0], [0], [1], [0, 0, 1, 1], [], []>} : vector<1x16xf32>, vector<16x2xf32>, vector<1x2xf32> -> vector<1x2xf32>
    %cst_12 = arith.constant 0.000000e+00 : f32
    %25 = vector.broadcast %cst_12 : f32 to vector<1x2xf32>
    %26 = arith.maximumf %24, %25 : vector<1x2xf32>
    %cst_13 = arith.constant dense<0.000000e+00> : vector<1x2xf32>
    %27 = tpu.matmul %23, %0, %cst_13 {dimension_numbers = #tpu.dot_dimension_numbers<[1], [0], [0], [1], [0, 0, 1, 1], [], []>} : vector<1x16xf32>, vector<16x2xf32>, vector<1x2xf32> -> vector<1x2xf32>
    %cst_14 = arith.constant 0.000000e+00 : f32
    %28 = vector.broadcast %cst_14 : f32 to vector<1x2xf32>
    %29 = arith.maximumf %27, %28 : vector<1x2xf32>
    %30 = arith.addf %26, %29 : vector<1x2xf32>
    %cst_15 = arith.constant dense<0.000000e+00> : vector<1x16xf32>
    %31 = tpu.matmul %30, %1, %cst_15 {dimension_numbers = #tpu.dot_dimension_numbers<[1], [0], [0], [1], [0, 0, 1, 1], [], []>} : vector<1x2xf32>, vector<2x16xf32>, vector<1x16xf32> -> vector<1x16xf32>
    %32 = arith.negf %31 : vector<1x16xf32>
    %33 = math.exp %32 : vector<1x16xf32>
    %cst_16 = arith.constant 1.000000e+00 : f32
    %34 = vector.broadcast %cst_16 : f32 to vector<1x16xf32>
    %35 = arith.addf %34, %33 : vector<1x16xf32>
    %36 = arith.divf %34, %35 : vector<1x16xf32>
    %c0_17 = arith.constant 0 : index
    %c0_18 = arith.constant 0 : index
    %c0_19 = arith.constant 0 : index
    %37 = vector.load %arg4[%c0_17, %c0_18, %c0_19] : memref<2x1x16xf32, #tpu.memory_space<vmem>>, vector<1x1x16xf32>
    %38 = vector.shape_cast %37 : vector<1x1x16xf32> to vector<1x16xf32>
    %39 = vector.shape_cast %36 : vector<1x16xf32> to vector<1x1x16xf32>
    tpu.vector_store %arg4[%c0_17, %c0_18, %c0_19], %39 {strides = array<i32>} : memref<2x1x16xf32, #tpu.memory_space<vmem>>, vector<1x1x16xf32>,
    %c1 = arith.constant 1 : index
    %c0_20 = arith.constant 0 : index
    %c0_21 = arith.constant 0 : index
    %40 = vector.load %arg1[%c1, %c0_20, %c0_21] : memref<2x16x256xf32, #tpu.memory_space<vmem>>, vector<1x16x256xf32>
    %41 = vector.shape_cast %40 : vector<1x16x256xf32> to vector<16x256xf32>
    %cst_22 = arith.constant dense<0.000000e+00> : vector<16xf32>
    %42 = vector.multi_reduction <add>, %41, %cst_22 [1] : vector<16x256xf32> to vector<16xf32>
    %43 = vector.shape_cast %42 : vector<16xf32> to vector<16x1xf32>
    %cst_23 = arith.constant dense<0xFF800000> : vector<16xf32>
    %44 = vector.multi_reduction <maximumf>, %41, %cst_23 [1] : vector<16x256xf32> to vector<16xf32>
    %45 = vector.shape_cast %44 : vector<16xf32> to vector<16x1xf32>
    %46 = vector.broadcast %43 : vector<16x1xf32> to vector<16x128xf32>
    %47 = vector.broadcast %2 : vector<1x128xf32> to vector<16x128xf32>
    %48 = arith.mulf %46, %47 : vector<16x128xf32>
    %cst_24 = arith.constant dense<0.000000e+00> : vector<1x16xf32>
    %49 = tpu.matmul %7, %48, %cst_24 {dimension_numbers = #tpu.dot_dimension_numbers<[1], [1], [0], [0], [0, 0, 1, 0], [], []>} : vector<1x128xf32>, vector<16x128xf32>, vector<1x16xf32> -> vector<1x16xf32>
    %cst_25 = arith.constant 3.906250e-03 : f32
    %50 = vector.broadcast %cst_25 : f32 to vector<1x16xf32>
    %51 = arith.mulf %49, %50 : vector<1x16xf32>
    %52 = vector.broadcast %45 : vector<16x1xf32> to vector<16x128xf32>
    %53 = vector.broadcast %2 : vector<1x128xf32> to vector<16x128xf32>
    %54 = arith.mulf %52, %53 : vector<16x128xf32>
    %cst_26 = arith.constant dense<0.000000e+00> : vector<1x16xf32>
    %55 = tpu.matmul %7, %54, %cst_26 {dimension_numbers = #tpu.dot_dimension_numbers<[1], [1], [0], [0], [0, 0, 1, 0], [], []>} : vector<1x128xf32>, vector<16x128xf32>, vector<1x16xf32> -> vector<1x16xf32>
    %cst_27 = arith.constant dense<0.000000e+00> : vector<1x2xf32>
    %56 = tpu.matmul %51, %0, %cst_27 {dimension_numbers = #tpu.dot_dimension_numbers<[1], [0], [0], [1], [0, 0, 1, 1], [], []>} : vector<1x16xf32>, vector<16x2xf32>, vector<1x2xf32> -> vector<1x2xf32>
    %cst_28 = arith.constant 0.000000e+00 : f32
    %57 = vector.broadcast %cst_28 : f32 to vector<1x2xf32>
    %58 = arith.maximumf %56, %57 : vector<1x2xf32>
    %cst_29 = arith.constant dense<0.000000e+00> : vector<1x2xf32>
    %59 = tpu.matmul %55, %0, %cst_29 {dimension_numbers = #tpu.dot_dimension_numbers<[1], [0], [0], [1], [0, 0, 1, 1], [], []>} : vector<1x16xf32>, vector<16x2xf32>, vector<1x2xf32> -> vector<1x2xf32>
    %cst_30 = arith.constant 0.000000e+00 : f32
    %60 = vector.broadcast %cst_30 : f32 to vector<1x2xf32>
    %61 = arith.maximumf %59, %60 : vector<1x2xf32>
    %62 = arith.addf %58, %61 : vector<1x2xf32>
    %cst_31 = arith.constant dense<0.000000e+00> : vector<1x16xf32>
    %63 = tpu.matmul %62, %1, %cst_31 {dimension_numbers = #tpu.dot_dimension_numbers<[1], [0], [0], [1], [0, 0, 1, 1], [], []>} : vector<1x2xf32>, vector<2x16xf32>, vector<1x16xf32> -> vector<1x16xf32>
    %64 = arith.negf %63 : vector<1x16xf32>
    %65 = math.exp %64 : vector<1x16xf32>
    %cst_32 = arith.constant 1.000000e+00 : f32
    %66 = vector.broadcast %cst_32 : f32 to vector<1x16xf32>
    %67 = arith.addf %66, %65 : vector<1x16xf32>
    %68 = arith.divf %66, %67 : vector<1x16xf32>
    %c1_33 = arith.constant 1 : index
    %c0_34 = arith.constant 0 : index
    %c0_35 = arith.constant 0 : index
    %69 = vector.load %arg4[%c1_33, %c0_34, %c0_35] : memref<2x1x16xf32, #tpu.memory_space<vmem>>, vector<1x1x16xf32>
    %70 = vector.shape_cast %69 : vector<1x1x16xf32> to vector<1x16xf32>
    %71 = vector.shape_cast %68 : vector<1x16xf32> to vector<1x1x16xf32>
    tpu.vector_store %arg4[%c1_33, %c0_34, %c0_35], %71 {strides = array<i32>} : memref<2x1x16xf32, #tpu.memory_space<vmem>>, vector<1x1x16xf32>,
    return
  }
  func.func @transform_0(%arg0: i32) -> (i32, i32, i32) {
    %c0_i32 = arith.constant 0 : i32
    %c0_i32_0 = arith.constant 0 : i32
    %c0_i32_1 = arith.constant 0 : i32
    return %arg0, %c0_i32, %c0_i32_0 : i32, i32, i32
  }
  func.func @transform_1(%arg0: i32) -> (i32, i32) {
    %c0_i32 = arith.constant 0 : i32
    %c0_i32_0 = arith.constant 0 : i32
    %c0_i32_1 = arith.constant 0 : i32
    return %c0_i32, %c0_i32_0 : i32, i32
  }
  func.func @transform_2(%arg0: i32) -> (i32, i32) {
    %c0_i32 = arith.constant 0 : i32
    %c0_i32_0 = arith.constant 0 : i32
    %c0_i32_1 = arith.constant 0 : i32
    return %c0_i32, %c0_i32_0 : i32, i32
  }
  func.func @transform_3(%arg0: i32) -> (i32, i32, i32) {
    %c0_i32 = arith.constant 0 : i32
    %c0_i32_0 = arith.constant 0 : i32
    %c0_i32_1 = arith.constant 0 : i32
    return %arg0, %c0_i32, %c0_i32_0 : i32, i32, i32
  }
}

</mosaic_0001>

<llo_original>
// kernel: tpu_custom_call.1
$region0: #{tpu_custom_call.1}
  #allocation0 [shape = 'u32[]', space=smem, size = 0x4, offset = 0x4, fixed_abs, tag = 'smem constant byte address 0x4 - core index']
  #allocation1 [shape = 'u32[72,128]{1,0:T(1,128)}', space=vmem, size = 0x9000, scoped, tag = 'internal scratch']
  %s0 = inlined_call_operand.hbm [shape: f32[2,16,256], index: 0, kind: input, shape index: {}]
  %s1 = inlined_call_operand.vmem [shape: f32[16,2], index: 1, kind: input, shape index: {}]
  %s2 = inlined_call_operand.vmem [shape: f32[2,16], index: 2, kind: input, shape index: {}]
  %s3 = inlined_call_operand.hbm [shape: f32[2,1,16], index: 3, kind: output, shape index: {}]
  %s4 = sld [smem:[#allocation0]]
  $region26: #{tpu_custom_call.1} parent=0
    _
  %s6 = ssub.s32 1, %s4
  %s7 = scalar_select 0, %s6, %s4
  $region1: #{tpu_custom_call.1} parent=0
    #allocation2 [shape = 'u8[32768]{0}', space=vmem, size = 0x8000, scoped, tag = 'input window, operand 0, single buffered']
    #allocation3 [shape = 's32[1]{0}', space=sflag, size = 0x4, scoped, tag = 'scoped memory for tpu_custom_call.1']
    #allocation4 [shape = 's32[1]{0}', space=sflag, size = 0x4, scoped, tag = 'scoped memory for tpu_custom_call.1']
    #allocation5 [shape = 'u8[1024]{0}', space=vmem, size = 0x400, scoped, tag = 'output window, operand 0, single buffered']
    %8 = vsyncpa [#allocation3], 0
    %9 = vsyncpa [#allocation4], 0
    // Predicated region
    $region2: #{tpu_custom_call.1} parent=1 // pred_check
      _
    $region3: #{tpu_custom_call.1} parent=1 // pred_check_branch
      %11 = sbr.rel (0) target = $region5
    $region4: #{tpu_custom_call.1} parent=1 // pred_region
      %13 = vsyncadd [#allocation3], 0
      %s14 = sshll.u32 %s0, 4
      %s15 = int_to_ptr.hbm [resolvable:$true] %s14
      %s16 = sshll.u32 [#allocation2], 4
      %s17 = int_to_ptr.vmem [resolvable:$true] %s16
      %22 = dma.hbm_to_vmem [thread:$0]  %s15, 1024, %s17, [#allocation3], 256, 256, 16
    $region5: #{tpu_custom_call.1} parent=1 // pred_fallthru
      _
    // Predicated region
    $region6: #{tpu_custom_call.1} parent=1 // pred_check
      _
    $region7: #{tpu_custom_call.1} parent=1 // pred_check_branch
      %24 = sbr.rel (0) target = $region9
    $region8: #{tpu_custom_call.1} parent=1 // pred_region
      _
    $region9: #{tpu_custom_call.1} parent=1 // pred_fallthru
      _
    // Predicated region
    $region10: #{tpu_custom_call.1} parent=1 // pred_check
      _
    $region11: #{tpu_custom_call.1} parent=1 // pred_check_branch
      %26 = sbr.rel (0) target = $region13
    $region12: #{tpu_custom_call.1} parent=1 // pred_region
      _
    $region13: #{tpu_custom_call.1} parent=1 // pred_fallthru
      _
    // Predicated region
    $region14: #{tpu_custom_call.1} parent=1 // pred_check
      _
    $region15: #{tpu_custom_call.1} parent=1 // pred_check_branch
      %28 = sbr.rel (0) target = $region17
    $region16: #{tpu_custom_call.1} parent=1 // pred_region
      %30 = dma.done [#allocation3], 1024
    $region17: #{tpu_custom_call.1} parent=1 // pred_fallthru
      _
    %v31 = vld [vmem:[%s1] sm:$0xff]
    %v32 = vld [vmem:[%s1 + $0x8] sm:$0xff]
    %v33 = vld [vmem:[%s2] sm:$0x3]
    %v34 = vlaneseq
    %v35 = vand.u32 %v34, 127
    %vm36 = vcmp.eq.s32.totalorder %v35, 0
    %v37 = vsel %vm36, 1, 0
    %v38 = vcvt.s32.f32 %v37
    %v39 = vld [vmem:[#allocation2] sm:$0xff]
    %v40 = vld [vmem:[#allocation2 + $0x8] sm:$0xff]
    %v41 = vld [vmem:[#allocation2 + $0x10] sm:$0xff]
    %v42 = vld [vmem:[#allocation2 + $0x18] sm:$0xff]
    %v43 = vadd.f32 %v39, %v40
    %44 = vadd.xlane.f32.xlu0 %v43
    %v45 = vpop.xlane.xlu0 %44
    %v46 = vadd.f32 %v41, %v42
    %47 = vadd.xlane.f32.xlu0 %v46
    %v48 = vpop.xlane.xlu0 %47
    %v49 = vmax.f32 %v39, %v40
    %50 = vmax.xlane.f32.xlu0 %v49
    %v51 = vpop.xlane.xlu0 %50
    %v52 = vmax.f32 %v41, %v42
    %53 = vmax.xlane.f32.xlu0 %v52
    %v54 = vpop.xlane.xlu0 %53
    %55 = vmatpush.xpose.msra.mxu0 0.0
    %56 = vmatpush.xpose.msra.mxu0 0.0
    %57 = vmatpush.xpose.msra.mxu0 0.0
    %58 = vmatpush.xpose.msra.mxu0 0.0
    %59 = vmatpush.xpose.msra.mxu0 0.0
    %60 = vmatpush.xpose.msra.mxu0 0.0
    %61 = vmatpush.xpose.msra.mxu0 0.0
    %62 = vmatpush.xpose.msra.mxu0 0.0
    %63 = vmatpush.xpose.msra.mxu0 0.0
    %64 = vmatpush.xpose.msra.mxu0 0.0
    %65 = vmatpush.xpose.msra.mxu0 0.0
    %66 = vmatpush.xpose.msra.mxu0 0.0
    %67 = vmatpush.xpose.msra.mxu0 0.0
    %68 = vmatpush.xpose.msra.mxu0 0.0
    %69 = vmatpush.xpose.msra.mxu0 %v48
    %70 = vmatpush.xpose.msra.mxu0 %v45
    %71 = vmatmul.f32.gmra.mxu0 %v38
    %v72 = vpop.f32.mrf.mxu0
    %v73 = vadd.f32 0.0, %v72
    %74 = vdwg.mxu0
    %v75 = vmul.f32 %v73, 0.00390625
    %76 = vmatpush.xpose.msra.mxu0 0.0
    %77 = vmatpush.xpose.msra.mxu0 0.0
    %78 = vmatpush.xpose.msra.mxu0 0.0
    %79 = vmatpush.xpose.msra.mxu0 0.0
    %80 = vmatpush.xpose.msra.mxu0 0.0
    %81 = vmatpush.xpose.msra.mxu0 0.0
    %82 = vmatpush.xpose.msra.mxu0 0.0
    %83 = vmatpush.xpose.msra.mxu0 0.0
    %84 = vmatpush.xpose.msra.mxu0 0.0
    %85 = vmatpush.xpose.msra.mxu0 0.0
    %86 = vmatpush.xpose.msra.mxu0 0.0
    %87 = vmatpush.xpose.msra.mxu0 0.0
    %88 = vmatpush.xpose.msra.mxu0 0.0
    %89 = vmatpush.xpose.msra.mxu0 0.0
    %90 = vmatpush.xpose.msra.mxu0 %v54
    %91 = vmatpush.xpose.msra.mxu0 %v51
    %92 = vmatmul.f32.gmra.mxu0 %v38
    %v93 = vpop.f32.mrf.mxu0
    %v94 = vadd.f32 0.0, %v93
    %95 = vdwg.mxu0
    %vm96 = vcmask 130048
    %v98 = vsel %vm96, %v75, 0
    %100 = vmatpush.msra.mxu0 0.0
    %101 = vmatpush.msra.mxu0 0.0
    %102 = vmatpush.msra.mxu0 0.0
    %103 = vmatpush.msra.mxu0 0.0
    %104 = vmatpush.msra.mxu0 0.0
    %105 = vmatpush.msra.mxu0 0.0
    %106 = vmatpush.msra.mxu0 0.0
    %107 = vmatpush.msra.mxu0 0.0
    %108 = vmatpush.msra.mxu0 0.0
    %109 = vmatpush.msra.mxu0 0.0
    %110 = vmatpush.msra.mxu0 0.0
    %111 = vmatpush.msra.mxu0 0.0
    %112 = vmatpush.msra.mxu0 0.0
    %113 = vmatpush.msra.mxu0 0.0
    %114 = vmatpush.msra.mxu0 %v32
    %115 = vmatpush.msra.mxu0 %v31
    %116 = vmatmul.f32.gmra.mxu0 %v98
    %v117 = vpop.f32.mrf.mxu0
    %v118 = vadd.f32 0.0, %v117
    %119 = vdwg.mxu0
    %v120 = vmax.f32 %v118, 0.0
    %v122 = vsel %vm96, %v94, 0
    %124 = vmatpush.msra.mxu0 0.0
    %125 = vmatpush.msra.mxu0 0.0
    %126 = vmatpush.msra.mxu0 0.0
    %127 = vmatpush.msra.mxu0 0.0
    %128 = vmatpush.msra.mxu0 0.0
    %129 = vmatpush.msra.mxu0 0.0
    %130 = vmatpush.msra.mxu0 0.0
    %131 = vmatpush.msra.mxu0 0.0
    %132 = vmatpush.msra.mxu0 0.0
    %133 = vmatpush.msra.mxu0 0.0
    %134 = vmatpush.msra.mxu0 0.0
    %135 = vmatpush.msra.mxu0 0.0
    %136 = vmatpush.msra.mxu0 0.0
    %137 = vmatpush.msra.mxu0 0.0
    %138 = vmatpush.msra.mxu0 %v32
    %139 = vmatpush.msra.mxu0 %v31
    %140 = vmatmul.f32.gmra.mxu0 %v122
    %v141 = vpop.f32.mrf.mxu0
    %v142 = vadd.f32 0.0, %v141
    %143 = vdwg.mxu0
    %v144 = vmax.f32 %v142, 0.0
    %v145 = vadd.f32 %v120, %v144
    %vm146 = vcmask 15360
    %v148 = vsel %vm146, %v145, 0
    %vm150 = vcmask 1041408
    %v152 = vsel %vm150, %v33, 0
    %154 = vmatpush.msra.mxu0 0.0
    %155 = vmatpush.msra.mxu0 0.0
    %156 = vmatpush.msra.mxu0 0.0
    %157 = vmatpush.msra.mxu0 0.0
    %158 = vmatpush.msra.mxu0 0.0
    %159 = vmatpush.msra.mxu0 0.0
    %160 = vmatpush.msra.mxu0 0.0
    %161 = vmatpush.msra.mxu0 0.0
    %162 = vmatpush.msra.mxu0 0.0
    %163 = vmatpush.msra.mxu0 0.0
    %164 = vmatpush.msra.mxu0 0.0
    %165 = vmatpush.msra.mxu0 0.0
    %166 = vmatpush.msra.mxu0 0.0
    %167 = vmatpush.msra.mxu0 0.0
    %168 = vmatpush.msra.mxu0 0.0
    %169 = vmatpush.msra.mxu0 %v152
    %170 = vmatmul.f32.gmra.mxu0 %v148
    %v171 = vpop.f32.mrf.mxu0
    %v172 = vadd.f32 0.0, %v171
    %173 = vdwg.mxu0
    %v174 = vxor.u32 %v172, 2147483648
    %v175 = vmul.f32 %v174, 1.442695
    %v176 = vpow.pop %v175
    %v177 = vadd.f32 %v176, 1.0
    %v178 = vrcp.pop %v177
    %v179 = vmul.f32 %v177, %v178
    %v180 = vsub.f32 1.0, %v179
    %v181 = vmul.f32 %v178, %v180
    %v182 = vadd.f32 %v178, %v181
    %vm183 = vweird.f32 %v177
    %vm184 = vweird.f32 %v178
    %vm185 = vmor %vm183, %vm184
    %v186 = vsel %vm185, %v178, %v182
    %v187 = vand.u32 2147483647, %v177
    %vm188 = vcmp.eq.f32.partialorder %v187, 8.507059e+37
    %v189 = vand.u32 %v177, 2147483648
    %v190 = vor.u32 1.1754944e-38, %v189
    %v191 = vsel %vm188, %v190, %v186
    %v192 = vmul.f32 1.0, %v191
    %vm193 = vcmask 122880
    %194 = vst.msk [vmem:[#allocation5] sm:$0x1] %vm193, %v192
    %s195 = scalar_lea.vmem [#allocation2], 32
    %v196 = vld [vmem:[%s195] sm:$0xff]
    %v197 = vld [vmem:[%s195 + $0x8] sm:$0xff]
    %v198 = vld [vmem:[%s195 + $0x10] sm:$0xff]
    %v199 = vld [vmem:[%s195 + $0x18] sm:$0xff]
    %v200 = vadd.f32 %v196, %v197
    %201 = vadd.xlane.f32.xlu0 %v200
    %v202 = vpop.xlane.xlu0 %201
    %v203 = vadd.f32 %v198, %v199
    %204 = vadd.xlane.f32.xlu0 %v203
    %v205 = vpop.xlane.xlu0 %204
    %v206 = vmax.f32 %v196, %v197
    %207 = vmax.xlane.f32.xlu0 %v206
    %v208 = vpop.xlane.xlu0 %207
    %v209 = vmax.f32 %v198, %v199
    %210 = vmax.xlane.f32.xlu0 %v209
    %v211 = vpop.xlane.xlu0 %210
    %212 = vmatpush.xpose.msra.mxu0 0.0
    %213 = vmatpush.xpose.msra.mxu0 0.0
    %214 = vmatpush.xpose.msra.mxu0 0.0
    %215 = vmatpush.xpose.msra.mxu0 0.0
    %216 = vmatpush.xpose.msra.mxu0 0.0
    %217 = vmatpush.xpose.msra.mxu0 0.0
    %218 = vmatpush.xpose.msra.mxu0 0.0
    %219 = vmatpush.xpose.msra.mxu0 0.0
    %220 = vmatpush.xpose.msra.mxu0 0.0
    %221 = vmatpush.xpose.msra.mxu0 0.0
    %222 = vmatpush.xpose.msra.mxu0 0.0
    %223 = vmatpush.xpose.msra.mxu0 0.0
    %224 = vmatpush.xpose.msra.mxu0 0.0
    %225 = vmatpush.xpose.msra.mxu0 0.0
    %226 = vmatpush.xpose.msra.mxu0 %v205
    %227 = vmatpush.xpose.msra.mxu0 %v202
    %228 = vmatmul.f32.gmra.mxu0 %v38
    %v229 = vpop.f32.mrf.mxu0
    %v230 = vadd.f32 0.0, %v229
    %231 = vdwg.mxu0
    %v232 = vmul.f32 %v230, 0.00390625
    %233 = vmatpush.xpose.msra.mxu0 0.0
    %234 = vmatpush.xpose.msra.mxu0 0.0
    %235 = vmatpush.xpose.msra.mxu0 0.0
    %236 = vmatpush.xpose.msra.mxu0 0.0
    %237 = vmatpush.xpose.msra.mxu0 0.0
    %238 = vmatpush.xpose.msra.mxu0 0.0
    %239 = vmatpush.xpose.msra.mxu0 0.0
    %240 = vmatpush.xpose.msra.mxu0 0.0
    %241 = vmatpush.xpose.msra.mxu0 0.0
    %242 = vmatpush.xpose.msra.mxu0 0.0
    %243 = vmatpush.xpose.msra.mxu0 0.0
    %244 = vmatpush.xpose.msra.mxu0 0.0
    %245 = vmatpush.xpose.msra.mxu0 0.0
    %246 = vmatpush.xpose.msra.mxu0 0.0
    %247 = vmatpush.xpose.msra.mxu0 %v211
    %248 = vmatpush.xpose.msra.mxu0 %v208
    %249 = vmatmul.f32.gmra.mxu0 %v38
    %v250 = vpop.f32.mrf.mxu0
    %v251 = vadd.f32 0.0, %v250
    %252 = vdwg.mxu0
    %v254 = vsel %vm96, %v232, 0
    %256 = vmatpush.msra.mxu0 0.0
    %257 = vmatpush.msra.mxu0 0.0
    %258 = vmatpush.msra.mxu0 0.0
    %259 = vmatpush.msra.mxu0 0.0
    %260 = vmatpush.msra.mxu0 0.0
    %261 = vmatpush.msra.mxu0 0.0
    %262 = vmatpush.msra.mxu0 0.0
    %263 = vmatpush.msra.mxu0 0.0
    %264 = vmatpush.msra.mxu0 0.0
    %265 = vmatpush.msra.mxu0 0.0
    %266 = vmatpush.msra.mxu0 0.0
    %267 = vmatpush.msra.mxu0 0.0
    %268 = vmatpush.msra.mxu0 0.0
    %269 = vmatpush.msra.mxu0 0.0
    %270 = vmatpush.msra.mxu0 %v32
    %271 = vmatpush.msra.mxu0 %v31
    %272 = vmatmul.f32.gmra.mxu0 %v254
    %v273 = vpop.f32.mrf.mxu0
    %v274 = vadd.f32 0.0, %v273
    %275 = vdwg.mxu0
    %v276 = vmax.f32 %v274, 0.0
    %v278 = vsel %vm96, %v251, 0
    %280 = vmatpush.msra.mxu0 0.0
    %281 = vmatpush.msra.mxu0 0.0
    %282 = vmatpush.msra.mxu0 0.0
    %283 = vmatpush.msra.mxu0 0.0
    %284 = vmatpush.msra.mxu0 0.0
    %285 = vmatpush.msra.mxu0 0.0
    %286 = vmatpush.msra.mxu0 0.0
    %287 = vmatpush.msra.mxu0 0.0
    %288 = vmatpush.msra.mxu0 0.0
    %289 = vmatpush.msra.mxu0 0.0
    %290 = vmatpush.msra.mxu0 0.0
    %291 = vmatpush.msra.mxu0 0.0
    %292 = vmatpush.msra.mxu0 0.0
    %293 = vmatpush.msra.mxu0 0.0
    %294 = vmatpush.msra.mxu0 %v32
    %295 = vmatpush.msra.mxu0 %v31
    %296 = vmatmul.f32.gmra.mxu0 %v278
    %v297 = vpop.f32.mrf.mxu0
    %v298 = vadd.f32 0.0, %v297
    %299 = vdwg.mxu0
    %v300 = vmax.f32 %v298, 0.0
    %v301 = vadd.f32 %v276, %v300
    %v303 = vsel %vm146, %v301, 0
    %305 = vmatpush.msra.mxu0 0.0
    %306 = vmatpush.msra.mxu0 0.0
    %307 = vmatpush.msra.mxu0 0.0
    %308 = vmatpush.msra.mxu0 0.0
    %309 = vmatpush.msra.mxu0 0.0
    %310 = vmatpush.msra.mxu0 0.0
    %311 = vmatpush.msra.mxu0 0.0
    %312 = vmatpush.msra.mxu0 0.0
    %313 = vmatpush.msra.mxu0 0.0
    %314 = vmatpush.msra.mxu0 0.0
    %315 = vmatpush.msra.mxu0 0.0
    %316 = vmatpush.msra.mxu0 0.0
    %317 = vmatpush.msra.mxu0 0.0
    %318 = vmatpush.msra.mxu0 0.0
    %319 = vmatpush.msra.mxu0 0.0
    %320 = vmatpush.msra.mxu0 %v152
    %321 = vmatmul.f32.gmra.mxu0 %v303
    %v322 = vpop.f32.mrf.mxu0
    %v323 = vadd.f32 0.0, %v322
    %324 = vdwg.mxu0
    %v325 = vxor.u32 %v323, 2147483648
    %v326 = vmul.f32 %v325, 1.442695
    %v327 = vpow.pop %v326
    %v328 = vadd.f32 %v327, 1.0
    %v329 = vrcp.pop %v328
    %v330 = vmul.f32 %v328, %v329
    %v331 = vsub.f32 1.0, %v330
    %v332 = vmul.f32 %v329, %v331
    %v333 = vadd.f32 %v329, %v332
    %vm334 = vweird.f32 %v328
    %vm335 = vweird.f32 %v329
    %vm336 = vmor %vm334, %vm335
    %v337 = vsel %vm336, %v329, %v333
    %v338 = vand.u32 2147483647, %v328
    %vm339 = vcmp.eq.f32.partialorder %v338, 8.507059e+37
    %v340 = vand.u32 %v328, 2147483648
    %v341 = vor.u32 1.1754944e-38, %v340
    %v342 = vsel %vm339, %v341, %v337
    %v343 = vmul.f32 1.0, %v342
    %s344 = scalar_lea.vmem [#allocation5], 1
    %345 = vst.msk [vmem:[%s344] sm:$0x1] %vm193, %v343
    // Predicated region
    $region18: #{tpu_custom_call.1} parent=1 // pred_check
      _
    $region19: #{tpu_custom_call.1} parent=1 // pred_check_branch
      %347 = sbr.rel (0) target = $region21
    $region20: #{tpu_custom_call.1} parent=1 // pred_region
      %349 = vsyncadd [#allocation4], 0
      %s350 = sshll.u32 [#allocation5], 4
      %s351 = int_to_ptr.vmem [resolvable:$true] %s350
      %s352 = sshll.u32 %s3, 4
      %s353 = int_to_ptr.hbm [resolvable:$true] %s352
      %358 = dma.vmem_to_hbm [thread:$0]  %s351, 32, %s353, [#allocation4], 16, 16, 1
    $region21: #{tpu_custom_call.1} parent=1 // pred_fallthru
      _
    // Predicated region
    $region22: #{tpu_custom_call.1} parent=1 // pred_check
      _
    $region23: #{tpu_custom_call.1} parent=1 // pred_check_branch
      %360 = sbr.rel (0) target = $region25
    $region24: #{tpu_custom_call.1} parent=1 // pred_region
      %362 = dma.done [#allocation4], 32
    $region25: #{tpu_custom_call.1} parent=1 // pred_fallthru
      _
    %363 = vsyncpa [#allocation3], 1
    %364 = vsyncpa [#allocation4], 1

</llo_original>
